<compile_context>
chip_gen: v7x
topology: tpu7x:2x2x1
jax: 0.10.0
libtpu: 0.0.40
codegen_flags: <defaults>
</compile_context>

<pallas_src>
import jax
import jax.numpy as jnp
import numpy as np
from jax.experimental import pallas as pl
from jax.experimental.pallas import tpu as pltpu


def _sigmoid(v):
    # Numerically stable sigmoid (tanh goes to the EUP; no transient inf).
    return 0.5 * (jnp.tanh(0.5 * v) + 1.0)


# ---------------------------------------------------------------------------
# Kernel A: channel attention vector + channel-wise mean/max pooled maps.
# ---------------------------------------------------------------------------
def _channel_att_kernel(x_ref, w1t_ref, b1_ref, w2t_ref, b2_ref,
                        att_ref, pooled_ref):
    # x_ref: (1, C, HW); full HW extent so spatial mean/max are exact
    # (tiling HW here would require -inf masking for the max / true-HW divide).
    x = x_ref[...]
    avg = jnp.mean(x, axis=-1)           # AdaptiveAvgPool2d(1) -> (1, C)
    mx = jnp.max(x, axis=-1)             # AdaptiveMaxPool2d(1) -> (1, C)

    # Fused MLP over both pooled vectors: one (2,C)x(C,h) + one (2,h)x(h,C).
    pm = jnp.concatenate([avg, mx], axis=0)                       # (2, C)
    h = jnp.dot(pm, w1t_ref[...],
                preferred_element_type=jnp.float32) + b1_ref[...]  # (2, hidden)
    h = jnp.where(h > 0, h, 0.01 * h)    # LeakyReLU (default negative_slope=0.01)
    o = jnp.dot(h, w2t_ref[...],
                preferred_element_type=jnp.float32) + b2_ref[...]  # (2, C)
    att = _sigmoid(o[0:1, :] + o[1:2, :])                          # (1, C)

    att_ref[...] = att[:, :, None]                                 # (1, C, 1)

    # y = x * att stays in VMEM; only its channel mean/max leave the kernel.
    y = x * att[:, :, None]                                        # (1, C, HW)
    pooled_ref[:, 0:1, :] = jnp.mean(y, axis=1, keepdims=True)     # channel mean
    pooled_ref[:, 1:2, :] = jnp.max(y, axis=1, keepdims=True)      # channel max


# ---------------------------------------------------------------------------
# Kernel B: lane-dense elementwise gate  out = x * att * scale.
# ---------------------------------------------------------------------------
def _gate_kernel(x_ref, att_ref, scale_ref, out_ref):
    # x_ref: (1, C, THW), att_ref: (1, C, 1), scale_ref: (1, 1, THW)
    out_ref[...] = x_ref[...] * att_ref[...] * scale_ref[...]


def _pick_hw_tile(hw, max_tile=2048):
    """Largest lane-dense tile (multiple of 128) dividing hw, capped so the
    double-buffered (C, tile) blocks stay well inside v7x's scoped VMEM."""
    if hw <= max_tile:
        return hw
    for t in range(max_tile, 127, -128):
        if hw % t == 0:
            return t
    return hw  # fall back to full extent


# ---------------------------------------------------------------------------
# Wrapper
# ---------------------------------------------------------------------------
def cbam_forward(x, params):
    w1, b1, w2, b2 = params["w1"], params["b1"], params["w2"], params["b2"]
    wconv, gamma, beta = params["wconv"], params["bn_gamma"], params["bn_beta"]
    B, C, H, W = x.shape
    HW = H * W
    hidden = w1.shape[0]

    x3 = x.reshape(B, C, HW).astype(jnp.float32)

    # --- Kernel A: channel attention + pooled maps (no y materialization) ----
    att, pooled = pl.pallas_call(
        _channel_att_kernel,
        out_shape=(jax.ShapeDtypeStruct((B, C, 1), jnp.float32),
                   jax.ShapeDtypeStruct((B, 2, HW), jnp.float32)),
        grid_spec=pltpu.PrefetchScalarGridSpec(
            num_scalar_prefetch=0,
            grid=(B,),
            in_specs=[
                pl.BlockSpec((1, C, HW), lambda b: (b, 0, 0)),
                pl.BlockSpec((C, hidden), lambda b: (0, 0)),
                pl.BlockSpec((1, hidden), lambda b: (0, 0)),
                pl.BlockSpec((hidden, C), lambda b: (0, 0)),
                pl.BlockSpec((1, C), lambda b: (0, 0)),
            ],
            out_specs=[
                pl.BlockSpec((1, C, 1), lambda b: (b, 0, 0)),
                pl.BlockSpec((1, 2, HW), lambda b: (b, 0, 0)),
            ],
        ),
        compiler_params=pltpu.CompilerParams(
            dimension_semantics=("parallel",)),
    )(x3, w1.T, b1.reshape(1, hidden), w2.T, b2.reshape(1, C))

    # --- Tiny spatial-attention head (plain JAX, negligible FLOPs) -----------
    # 7x7 conv over [mean_c, max_c], BatchNorm2d(1) batch stats, sigmoid.
    # Kept out of the big gating kernel so the BN full-batch reduction and the
    # 98-tap conv never sit on the critical path of the mem-bound gate.
    pooled4 = pooled.reshape(B, 2, H, W)
    conv = jax.lax.conv_general_dilated(
        pooled4, wconv.reshape(1, 2, 7, 7),
        window_strides=(1, 1), padding=((3, 3), (3, 3)),
        dimension_numbers=("NCHW", "OIHW", "NCHW"))                # (B, 1, H, W)
    m = jnp.mean(conv)
    v = jnp.mean((conv - m) ** 2)
    bn = (conv - m) * jax.lax.rsqrt(v + 1e-5) * gamma + beta
    scale3 = jax.nn.sigmoid(bn).reshape(B, 1, HW)

    # --- Kernel B: pipelined, lane-dense gate --------------------------------
    thw = _pick_hw_tile(HW)
    out3 = pl.pallas_call(
        _gate_kernel,
        out_shape=jax.ShapeDtypeStruct((B, C, HW), jnp.float32),
        grid_spec=pltpu.PrefetchScalarGridSpec(
            num_scalar_prefetch=0,
            grid=(B, HW // thw),
            in_specs=[
                pl.BlockSpec((1, C, thw), lambda b, t: (b, 0, t)),
                pl.BlockSpec((1, C, 1), lambda b, t: (b, 0, 0)),
                pl.BlockSpec((1, 1, thw), lambda b, t: (b, 0, t)),
            ],
            out_specs=pl.BlockSpec((1, C, thw), lambda b, t: (b, 0, t)),
        ),
        compiler_params=pltpu.CompilerParams(
            dimension_semantics=("parallel", "parallel")),
    )(x3, att, scale3)

    return out3.reshape(B, C, H, W)


# ---------------------------------------------------------------------------
# Pure-JAX reference (mirrors the PyTorch forward) for a correctness check.
# ---------------------------------------------------------------------------
def cbam_reference(x, params):
    w1, b1, w2, b2 = params["w1"], params["b1"], params["w2"], params["b2"]
    wconv, gamma, beta = params["wconv"], params["bn_gamma"], params["bn_beta"]
    avg = x.mean(axis=(2, 3))
    mx = x.max(axis=(2, 3))

    def mlp(v):
        h = v @ w1.T + b1
        h = jnp.where(h > 0, h, 0.01 * h)
        return h @ w2.T + b2

    att = jax.nn.sigmoid(mlp(avg) + mlp(mx))
    y = x * att[:, :, None, None]
    cmean = y.mean(axis=1, keepdims=True)
    cmax = y.max(axis=1, keepdims=True)
    pooled = jnp.concatenate([cmean, cmax], axis=1)
    conv = jax.lax.conv_general_dilated(
        pooled, wconv.reshape(1, 2, 7, 7),
        window_strides=(1, 1), padding=((3, 3), (3, 3)),
        dimension_numbers=("NCHW", "OIHW", "NCHW"))
    m = conv.mean()
    v = ((conv - m) ** 2).mean()
    bn = (conv - m) * jax.lax.rsqrt(v + 1e-5) * gamma + beta
    return y * jax.nn.sigmoid(bn)


if __name__ == "__main__":
    B, C, H, W = 2, 32, 16, 16
    reduction_ratio = 16
    hidden = C // reduction_ratio

    key = jax.random.PRNGKey(0)
    kx, k1, k2, k3, k4, k5 = jax.random.split(key, 6)

    x = jax.random.normal(kx, (B, C, H, W), dtype=jnp.float32)

    params = {
        # Linear(C -> C//r)
        "w1": 0.2 * jax.random.normal(k1, (hidden, C), dtype=jnp.float32),
        "b1": 0.1 * jax.random.normal(k2, (hidden,), dtype=jnp.float32),
        # Linear(C//r -> C)
        "w2": 0.2 * jax.random.normal(k3, (C, hidden), dtype=jnp.float32),
        "b2": 0.1 * jax.random.normal(k4, (C,), dtype=jnp.float32),
        # Conv2d(2 -> 1, k=7, bias=False); stored as (2, 7, 7)
        "wconv": 0.1 * jax.random.normal(k5, (2, 7, 7), dtype=jnp.float32),
        # BatchNorm2d(1) affine params at init values
        "bn_gamma": jnp.float32(1.0),
        "bn_beta": jnp.float32(0.0),
    }

    out = cbam_forward(x, params)
    out = jax.block_until_ready(out)

    ref = jax.block_until_ready(cbam_reference(x, params))
    np.testing.assert_allclose(np.asarray(out), np.asarray(ref),
                               rtol=2e-4, atol=2e-5)

    print("KERNEL_OK")
</pallas_src>

<mosaic_0001>
module attributes {stable_mosaic.version = 11 : i64} {
  func.func @_channel_att_kernel(%arg0: i32, %arg1: memref<1x32x256xf32, #tpu.memory_space<vmem>>, %arg2: memref<32x2xf32, #tpu.memory_space<vmem>>, %arg3: memref<1x2xf32, #tpu.memory_space<vmem>>, %arg4: memref<2x32xf32, #tpu.memory_space<vmem>>, %arg5: memref<1x32xf32, #tpu.memory_space<vmem>>, %arg6: memref<1x32x1xf32, #tpu.memory_space<vmem>>, %arg7: memref<1x2x256xf32, #tpu.memory_space<vmem>>) attributes {dimension_semantics = [#tpu.dimension_semantics<parallel>], iteration_bounds = array<i64: 2>, scalar_prefetch = 0 : i64, scratch_operands = 0 : i64, tpu.core_type = #tpu.core_type<tc>, window_params = [{transform_indices = @transform_0, window_bounds = array<i64: 1, 32, 256>}, {pipeline_mode = #tpu.pipeline_mode<synchronous>, transform_indices = @transform_1, window_bounds = array<i64: 32, 2>}, {pipeline_mode = #tpu.pipeline_mode<synchronous>, transform_indices = @transform_2, window_bounds = array<i64: 1, 2>}, {pipeline_mode = #tpu.pipeline_mode<synchronous>, transform_indices = @transform_3, window_bounds = array<i64: 2, 32>}, {pipeline_mode = #tpu.pipeline_mode<synchronous>, transform_indices = @transform_4, window_bounds = array<i64: 1, 32>}, {transform_indices = @transform_5, window_bounds = array<i64: 1, 32, 1>}, {transform_indices = @transform_6, window_bounds = array<i64: 1, 2, 256>}]} {
    %c0 = arith.constant 0 : index
    %c0_0 = arith.constant 0 : index
    %c0_1 = arith.constant 0 : index
    %0 = vector.load %arg1[%c0, %c0_0, %c0_1] : memref<1x32x256xf32, #tpu.memory_space<vmem>>, vector<1x32x256xf32>
    %cst = arith.constant dense<0.000000e+00> : vector<1x32xf32>
    %1 = vector.multi_reduction <add>, %0, %cst [2] : vector<1x32x256xf32> to vector<1x32xf32>
    %cst_2 = arith.constant 2.560000e+02 : f32
    %2 = vector.broadcast %cst_2 : f32 to vector<1x32xf32>
    %3 = arith.divf %1, %2 : vector<1x32xf32>
    %cst_3 = arith.constant dense<0xFF800000> : vector<1x32xf32>
    %4 = vector.multi_reduction <maximumf>, %0, %cst_3 [2] : vector<1x32x256xf32> to vector<1x32xf32>
    %5 = tpu.concatenate %3, %4 in 0 : vector<1x32xf32>, vector<1x32xf32> -> vector<2x32xf32>
    %c0_4 = arith.constant 0 : index
    %c0_5 = arith.constant 0 : index
    %6 = vector.load %arg2[%c0_4, %c0_5] : memref<32x2xf32, #tpu.memory_space<vmem>>, vector<32x2xf32>
    %cst_6 = arith.constant dense<0.000000e+00> : vector<2x2xf32>
    %7 = tpu.matmul %5, %6, %cst_6 {dimension_numbers = #tpu.dot_dimension_numbers<[1], [0], [0], [1], [0, 0, 1, 1], [], []>} : vector<2x32xf32>, vector<32x2xf32>, vector<2x2xf32> -> vector<2x2xf32>
    %c0_7 = arith.constant 0 : index
    %c0_8 = arith.constant 0 : index
    %8 = vector.load %arg3[%c0_7, %c0_8] : memref<1x2xf32, #tpu.memory_space<vmem>>, vector<1x2xf32>
    %9 = vector.broadcast %8 : vector<1x2xf32> to vector<2x2xf32>
    %10 = arith.addf %7, %9 : vector<2x2xf32>
    %cst_9 = arith.constant 0.000000e+00 : f32
    %11 = vector.broadcast %cst_9 : f32 to vector<2x2xf32>
    %12 = arith.cmpf ogt, %10, %11 : vector<2x2xf32>
    %cst_10 = arith.constant 0.00999999977 : f32
    %13 = vector.broadcast %cst_10 : f32 to vector<2x2xf32>
    %14 = arith.mulf %13, %10 : vector<2x2xf32>
    %15 = arith.select %12, %10, %14 : vector<2x2xi1>, vector<2x2xf32>
    %c0_11 = arith.constant 0 : index
    %c0_12 = arith.constant 0 : index
    %16 = vector.load %arg4[%c0_11, %c0_12] : memref<2x32xf32, #tpu.memory_space<vmem>>, vector<2x32xf32>
    %cst_13 = arith.constant dense<0.000000e+00> : vector<2x32xf32>
    %17 = tpu.matmul %15, %16, %cst_13 {dimension_numbers = #tpu.dot_dimension_numbers<[1], [0], [0], [1], [0, 0, 1, 1], [], []>} : vector<2x2xf32>, vector<2x32xf32>, vector<2x32xf32> -> vector<2x32xf32>
    %c0_14 = arith.constant 0 : index
    %c0_15 = arith.constant 0 : index
    %18 = vector.load %arg5[%c0_14, %c0_15] : memref<1x32xf32, #tpu.memory_space<vmem>>, vector<1x32xf32>
    %19 = vector.broadcast %18 : vector<1x32xf32> to vector<2x32xf32>
    %20 = arith.addf %17, %19 : vector<2x32xf32>
    %21 = vector.extract_strided_slice %20 {offsets = [0, 0], sizes = [1, 32], strides = [1, 1]} : vector<2x32xf32> to vector<1x32xf32>
    %22 = vector.extract_strided_slice %20 {offsets = [1, 0], sizes = [1, 32], strides = [1, 1]} : vector<2x32xf32> to vector<1x32xf32>
    %23 = arith.addf %21, %22 : vector<1x32xf32>
    %cst_16 = arith.constant 5.000000e-01 : f32
    %24 = vector.broadcast %cst_16 : f32 to vector<1x32xf32>
    %25 = arith.mulf %24, %23 : vector<1x32xf32>
    %26 = math.tanh %25 : vector<1x32xf32>
    %cst_17 = arith.constant 1.000000e+00 : f32
    %27 = vector.broadcast %cst_17 : f32 to vector<1x32xf32>
    %28 = arith.addf %26, %27 : vector<1x32xf32>
    %cst_18 = arith.constant 5.000000e-01 : f32
    %29 = vector.broadcast %cst_18 : f32 to vector<1x32xf32>
    %30 = arith.mulf %29, %28 : vector<1x32xf32>
    %31 = vector.shape_cast %30 : vector<1x32xf32> to vector<1x32x1xf32>
    %c0_19 = arith.constant 0 : index
    %c0_20 = arith.constant 0 : index
    %c0_21 = arith.constant 0 : index
    %32 = vector.load %arg6[%c0_19, %c0_20, %c0_21] : memref<1x32x1xf32, #tpu.memory_space<vmem>>, vector<1x32x1xf32>
    tpu.vector_store %arg6[%c0_19, %c0_20, %c0_21], %31 {strides = array<i32>} : memref<1x32x1xf32, #tpu.memory_space<vmem>>, vector<1x32x1xf32>,
    %33 = vector.shape_cast %30 : vector<1x32xf32> to vector<1x32x1xf32>
    %34 = vector.broadcast %33 : vector<1x32x1xf32> to vector<1x32x256xf32>
    %35 = arith.mulf %0, %34 : vector<1x32x256xf32>
    %cst_22 = arith.constant dense<0.000000e+00> : vector<1x256xf32>
    %36 = vector.multi_reduction <add>, %35, %cst_22 [1] : vector<1x32x256xf32> to vector<1x256xf32>
    %37 = vector.shape_cast %36 : vector<1x256xf32> to vector<1x1x256xf32>
    %cst_23 = arith.constant 3.200000e+01 : f32
    %38 = vector.broadcast %cst_23 : f32 to vector<1x1x256xf32>
    %39 = arith.divf %37, %38 : vector<1x1x256xf32>
    %c0_24 = arith.constant 0 : index
    %c0_25 = arith.constant 0 : index
    %c0_26 = arith.constant 0 : index
    %40 = vector.load %arg7[%c0_24, %c0_25, %c0_26] : memref<1x2x256xf32, #tpu.memory_space<vmem>>, vector<1x1x256xf32>
    tpu.vector_store %arg7[%c0_24, %c0_25, %c0_26], %39 {strides = array<i32>} : memref<1x2x256xf32, #tpu.memory_space<vmem>>, vector<1x1x256xf32>,
    %cst_27 = arith.constant dense<0xFF800000> : vector<1x256xf32>
    %41 = vector.multi_reduction <maximumf>, %35, %cst_27 [1] : vector<1x32x256xf32> to vector<1x256xf32>
    %42 = vector.shape_cast %41 : vector<1x256xf32> to vector<1x1x256xf32>
    %c0_28 = arith.constant 0 : index
    %c1 = arith.constant 1 : index
    %c0_29 = arith.constant 0 : index
    %43 = vector.load %arg7[%c0_28, %c1, %c0_29] : memref<1x2x256xf32, #tpu.memory_space<vmem>>, vector<1x1x256xf32>
    tpu.vector_store %arg7[%c0_28, %c1, %c0_29], %42 {strides = array<i32>} : memref<1x2x256xf32, #tpu.memory_space<vmem>>, vector<1x1x256xf32>,
    return
  }
  func.func @transform_0(%arg0: i32) -> (i32, i32, i32) {
    %c0_i32 = arith.constant 0 : i32
    %c0_i32_0 = arith.constant 0 : i32
    %c0_i32_1 = arith.constant 0 : i32
    return %arg0, %c0_i32, %c0_i32_0 : i32, i32, i32
  }
  func.func @transform_1(%arg0: i32) -> (i32, i32) {
    %c0_i32 = arith.constant 0 : i32
    %c0_i32_0 = arith.constant 0 : i32
    %c0_i32_1 = arith.constant 0 : i32
    return %c0_i32, %c0_i32_0 : i32, i32
  }
  func.func @transform_2(%arg0: i32) -> (i32, i32) {
    %c0_i32 = arith.constant 0 : i32
    %c0_i32_0 = arith.constant 0 : i32
    %c0_i32_1 = arith.constant 0 : i32
    return %c0_i32, %c0_i32_0 : i32, i32
  }
  func.func @transform_3(%arg0: i32) -> (i32, i32) {
    %c0_i32 = arith.constant 0 : i32
    %c0_i32_0 = arith.constant 0 : i32
    %c0_i32_1 = arith.constant 0 : i32
    return %c0_i32, %c0_i32_0 : i32, i32
  }
  func.func @transform_4(%arg0: i32) -> (i32, i32) {
    %c0_i32 = arith.constant 0 : i32
    %c0_i32_0 = arith.constant 0 : i32
    %c0_i32_1 = arith.constant 0 : i32
    return %c0_i32, %c0_i32_0 : i32, i32
  }
  func.func @transform_5(%arg0: i32) -> (i32, i32, i32) {
    %c0_i32 = arith.constant 0 : i32
    %c0_i32_0 = arith.constant 0 : i32
    %c0_i32_1 = arith.constant 0 : i32
    return %arg0, %c0_i32, %c0_i32_0 : i32, i32, i32
  }
  func.func @transform_6(%arg0: i32) -> (i32, i32, i32) {
    %c0_i32 = arith.constant 0 : i32
    %c0_i32_0 = arith.constant 0 : i32
    %c0_i32_1 = arith.constant 0 : i32
    return %arg0, %c0_i32, %c0_i32_0 : i32, i32, i32
  }
}

</mosaic_0001>

<llo_original>
// kernel: tpu_custom_call.1
$region0: #{tpu_custom_call.1}
  #allocation0 [shape = 'u32[]', space=smem, size = 0x4, offset = 0x4, fixed_abs, tag = 'smem constant byte address 0x4 - core index']
  #allocation1 [shape = 'u32[144,128]{1,0:T(1,128)}', space=vmem, size = 0x12000, scoped, tag = 'internal scratch']
  %s0 = inlined_call_operand.hbm [shape: f32[2,32,256], index: 0, kind: input, shape index: {}]
  %s1 = inlined_call_operand.vmem [shape: f32[32,2], index: 1, kind: input, shape index: {}]
  %s2 = inlined_call_operand.vmem [shape: f32[1,2], index: 2, kind: input, shape index: {}]
  %s3 = inlined_call_operand.vmem [shape: f32[2,32], index: 3, kind: input, shape index: {}]
  %s4 = inlined_call_operand.vmem [shape: f32[1,32], index: 4, kind: input, shape index: {}]
  %s5 = inlined_call_operand.vmem [shape: f32[2,32,1], index: 5, kind: output, shape index: {0}]
  %s6 = inlined_call_operand.hbm [shape: f32[2,2,256], index: 6, kind: output, shape index: {1}]
  %7 = xla_tuple %s5, %s6
  %s8 = sld [smem:[#allocation0]]
  $region65: #{tpu_custom_call.1} parent=0
    _
  %s10 = ssub.s32 1, %s8
  %s11 = scalar_select 0, %s10, %s8
  $region1: #{tpu_custom_call.1} parent=0
    #allocation2 [shape = 'u8[65536]{0}', space=vmem, size = 0x10000, scoped, tag = 'input window, operand 0']
    #allocation3 [shape = 's32[2]{0}', space=sflag, size = 0x8, scoped, tag = 'scoped memory for tpu_custom_call.1']
    #allocation4 [shape = 's32[2]{0}', space=sflag, size = 0x8, scoped, tag = 'scoped memory for tpu_custom_call.1']
    #allocation5 [shape = 'u8[4096]{0}', space=vmem, size = 0x1000, scoped, tag = 'output window, operand 1']
    %12 = vsyncpa [#allocation3], 0
    %s13 = scalar_lea.sflag [#allocation3], 1
    %14 = vsyncpa %s13, 0
    %15 = vsyncpa [#allocation4], 0
    %s16 = scalar_lea.sflag [#allocation4], 1
    %17 = vsyncpa %s16, 0
    loop: start=0, step=1, limit=4
    $region2: #{tpu_custom_call.1} parent=1 // loop_pre_header
      _
    $region3: #{tpu_custom_call.1} parent=1 // loop_header
      %s19 = sphi 0, %s23
      %p20 = scmp.ge.s32.totalorder %s19, 4
      %s29 = sphi 0, %s31
      %s32 = sphi 0, %s29
      %s33 = sphi 0, %s32
      %s49 = sphi 0, %s33
      %s53 = sphi 0, %s53
      %s55 = sphi 0, %s53
      %s56 = sphi 0, %s55
      %s70 = sphi 0, %s56
      %s74 = sphi 0, %s74
      %s76 = sphi 0, %s74
      %s77 = sphi 0, %s76
      %s91 = sphi 0, %s77
      %s95 = sphi 0, %s95
      %s97 = sphi 0, %s95
      %s98 = sphi 0, %s97
      %s112 = sphi 0, %s98
      %s116 = sphi 0, %s116
      %s118 = sphi 0, %s116
      %s119 = sphi 0, %s118
      %s133 = sphi 0, %s119
      %s139 = sphi 0, %s141
      %s142 = sphi 0, %s139
      %s143 = sphi 0, %s142
      %s159 = sphi 0, %s143
      %s165 = sphi 0, %s167
      %s168 = sphi 0, %s165
      %s169 = sphi 0, %s168
      %s185 = sphi 0, %s169
    $region4: #{tpu_custom_call.1} parent=1 // loop_header_branch
      %22 = sbr.rel (%p20) target = $region8
    $region5: #{tpu_custom_call.1} parent=1 // loop_body
      %s24 = ssub.s32 %s19, 1
      %s25 = ssub.s32 %s19, 2
      %s26 = sadd.s32 %s19, 1
      %s27 = ssub.s32 %s19, %s26
      %p28 = scmp.eq.s32.totalorder %s27, 0
      %s30 = sadd.s32 %s29, 1
      %s31 = scalar_select %p28, %s29, %s30
      %p34 = pneg %p28
      %p35 = scmp.eq.s32.totalorder %s19, 1
      %p36 = por %p34, %p35
      %p37 = scmp.ne.s32.totalorder %s29, %s32
      %p38 = scmp.eq.s32.totalorder %s19, 0
      %p39 = por %p37, %p38
      %p40 = scmp.ne.s32.totalorder %s29, %s32
      %p41 = scmp.eq.s32.totalorder %s24, 1
      %p42 = por %p40, %p41
      %p43 = scmp.ne.s32.totalorder %s32, %s33
      %p44 = scmp.eq.s32.totalorder %s24, 0
      %p45 = por %p43, %p44
      %p46 = scmp.ne.s32.totalorder %s32, %s33
      %p47 = scmp.eq.s32.totalorder %s25, 1
      %p48 = por %p46, %p47
      %p50 = scmp.ne.s32.totalorder %s33, %s49
      %p51 = scmp.eq.s32.totalorder %s25, 0
      %p52 = por %p50, %p51
      %s54 = sadd.s32 %s53, 1
      %p57 = scmp.eq.s32.totalorder %s19, 1
      %p58 = scmp.ne.s32.totalorder %s53, %s55
      %p59 = scmp.eq.s32.totalorder %s19, 0
      %p60 = por %p58, %p59
      %p61 = scmp.ne.s32.totalorder %s53, %s55
      %p62 = scmp.eq.s32.totalorder %s24, 1
      %p63 = por %p61, %p62
      %p64 = scmp.ne.s32.totalorder %s55, %s56
      %p65 = scmp.eq.s32.totalorder %s24, 0
      %p66 = por %p64, %p65
      %p67 = scmp.ne.s32.totalorder %s55, %s56
      %p68 = scmp.eq.s32.totalorder %s25, 1
      %p69 = por %p67, %p68
      %p71 = scmp.ne.s32.totalorder %s56, %s70
      %p72 = scmp.eq.s32.totalorder %s25, 0
      %p73 = por %p71, %p72
      %s75 = sadd.s32 %s74, 1
      %p78 = scmp.eq.s32.totalorder %s19, 1
      %p79 = scmp.ne.s32.totalorder %s74, %s76
      %p80 = scmp.eq.s32.totalorder %s19, 0
      %p81 = por %p79, %p80
      %p82 = scmp.ne.s32.totalorder %s74, %s76
      %p83 = scmp.eq.s32.totalorder %s24, 1
      %p84 = por %p82, %p83
      %p85 = scmp.ne.s32.totalorder %s76, %s77
      %p86 = scmp.eq.s32.totalorder %s24, 0
      %p87 = por %p85, %p86
      %p88 = scmp.ne.s32.totalorder %s76, %s77
      %p89 = scmp.eq.s32.totalorder %s25, 1
      %p90 = por %p88, %p89
      %p92 = scmp.ne.s32.totalorder %s77, %s91
      %p93 = scmp.eq.s32.totalorder %s25, 0
      %p94 = por %p92, %p93
      %s96 = sadd.s32 %s95, 1
      %p99 = scmp.eq.s32.totalorder %s19, 1
      %p100 = scmp.ne.s32.totalorder %s95, %s97
      %p101 = scmp.eq.s32.totalorder %s19, 0
      %p102 = por %p100, %p101
      %p103 = scmp.ne.s32.totalorder %s95, %s97
      %p104 = scmp.eq.s32.totalorder %s24, 1
      %p105 = por %p103, %p104
      %p106 = scmp.ne.s32.totalorder %s97, %s98
      %p107 = scmp.eq.s32.totalorder %s24, 0
      %p108 = por %p106, %p107
      %p109 = scmp.ne.s32.totalorder %s97, %s98
      %p110 = scmp.eq.s32.totalorder %s25, 1
      %p111 = por %p109, %p110
      %p113 = scmp.ne.s32.totalorder %s98, %s112
      %p114 = scmp.eq.s32.totalorder %s25, 0
      %p115 = por %p113, %p114
      %s117 = sadd.s32 %s116, 1
      %p120 = scmp.eq.s32.totalorder %s19, 1
      %p121 = scmp.ne.s32.totalorder %s116, %s118
      %p122 = scmp.eq.s32.totalorder %s19, 0
      %p123 = por %p121, %p122
      %p124 = scmp.ne.s32.totalorder %s116, %s118
      %p125 = scmp.eq.s32.totalorder %s24, 1
      %p126 = por %p124, %p125
      %p127 = scmp.ne.s32.totalorder %s118, %s119
      %p128 = scmp.eq.s32.totalorder %s24, 0
      %p129 = por %p127, %p128
      %p130 = scmp.ne.s32.totalorder %s118, %s119
      %p131 = scmp.eq.s32.totalorder %s25, 1
      %p132 = por %p130, %p131
      %p134 = scmp.ne.s32.totalorder %s119, %s133
      %p135 = scmp.eq.s32.totalorder %s25, 0
      %p136 = por %p134, %p135
      %s137 = ssub.s32 %s19, %s26
      %p138 = scmp.eq.s32.totalorder %s137, 0
      %s140 = sadd.s32 %s139, 1
      %s141 = scalar_select %p138, %s139, %s140
      %p144 = pneg %p138
      %p145 = scmp.eq.s32.totalorder %s19, 1
      %p146 = por %p144, %p145
      %p147 = scmp.ne.s32.totalorder %s139, %s142
      %p148 = scmp.eq.s32.totalorder %s19, 0
      %p149 = por %p147, %p148
      %p150 = scmp.ne.s32.totalorder %s139, %s142
      %p151 = scmp.eq.s32.totalorder %s24, 1
      %p152 = por %p150, %p151
      %p153 = scmp.ne.s32.totalorder %s142, %s143
      %p154 = scmp.eq.s32.totalorder %s24, 0
      %p155 = por %p153, %p154
      %p156 = scmp.ne.s32.totalorder %s142, %s143
      %p157 = scmp.eq.s32.totalorder %s25, 1
      %p158 = por %p156, %p157
      %p160 = scmp.ne.s32.totalorder %s143, %s159
      %p161 = scmp.eq.s32.totalorder %s25, 0
      %p162 = por %p160, %p161
      %s163 = ssub.s32 %s19, %s26
      %p164 = scmp.eq.s32.totalorder %s163, 0
      %s166 = sadd.s32 %s165, 1
      %s167 = scalar_select %p164, %s165, %s166
      %p170 = pneg %p164
      %p171 = scmp.eq.s32.totalorder %s19, 1
      %p172 = por %p170, %p171
      %p173 = scmp.ne.s32.totalorder %s165, %s168
      %p174 = scmp.eq.s32.totalorder %s19, 0
      %p175 = por %p173, %p174
      %p176 = scmp.ne.s32.totalorder %s165, %s168
      %p177 = scmp.eq.s32.totalorder %s24, 1
      %p178 = por %p176, %p177
      %p179 = scmp.ne.s32.totalorder %s168, %s169
      %p180 = scmp.eq.s32.totalorder %s24, 0
      %p181 = por %p179, %p180
      %p182 = scmp.ne.s32.totalorder %s168, %s169
      %p183 = scmp.eq.s32.totalorder %s25, 1
      %p184 = por %p182, %p183
      %p186 = scmp.ne.s32.totalorder %s169, %s185
      %p187 = scmp.eq.s32.totalorder %s25, 0
      %p188 = por %p186, %p187
      %p189 = scmp.le.s32.totalorder 1, %s19
      %p190 = scmp.lt.s32.totalorder %s19, 3
      %p191 = pnand %p189, %p190
      %p192 = pneg %p191
      // Predicated region
      $region9: #{tpu_custom_call.1} parent=5 // pred_check
        _
      $region10: #{tpu_custom_call.1} parent=5 // pred_check_branch
        %194 = sbr.rel (%p191) target = $region12
      $region11: #{tpu_custom_call.1} parent=5 // pred_region
        %s195 = ssub.s32 %s19, 1
        // Predicated region
        $region13: #{tpu_custom_call.1} parent=11 // pred_check
          %p196 = pneg %p66
        $region14: #{tpu_custom_call.1} parent=11 // pred_check_branch
          %198 = sbr.rel (%p196) target = $region16
        $region15: #{tpu_custom_call.1} parent=11 // pred_region
          _
        $region16: #{tpu_custom_call.1} parent=11 // pred_fallthru
          _
        // Predicated region
        $region17: #{tpu_custom_call.1} parent=11 // pred_check
          %p199 = pneg %p87
        $region18: #{tpu_custom_call.1} parent=11 // pred_check_branch
          %201 = sbr.rel (%p199) target = $region20
        $region19: #{tpu_custom_call.1} parent=11 // pred_region
          _
        $region20: #{tpu_custom_call.1} parent=11 // pred_fallthru
          _
        // Predicated region
        $region21: #{tpu_custom_call.1} parent=11 // pred_check
          %p202 = pneg %p108
        $region22: #{tpu_custom_call.1} parent=11 // pred_check_branch
          %204 = sbr.rel (%p202) target = $region24
        $region23: #{tpu_custom_call.1} parent=11 // pred_region
          _
        $region24: #{tpu_custom_call.1} parent=11 // pred_fallthru
          _
        // Predicated region
        $region25: #{tpu_custom_call.1} parent=11 // pred_check
          %p205 = pneg %p129
        $region26: #{tpu_custom_call.1} parent=11 // pred_check_branch
          %207 = sbr.rel (%p205) target = $region28
        $region27: #{tpu_custom_call.1} parent=11 // pred_region
          _
        $region28: #{tpu_custom_call.1} parent=11 // pred_fallthru
          _
      $region12: #{tpu_custom_call.1} parent=5 // pred_fallthru
        _
      %p208 = scmp.lt.s32.totalorder %s19, 2
      // Predicated region
      $region29: #{tpu_custom_call.1} parent=5 // pred_check
        %p209 = pneg %p208
      $region30: #{tpu_custom_call.1} parent=5 // pred_check_branch
        %211 = sbr.rel (%p209) target = $region32
      $region31: #{tpu_custom_call.1} parent=5 // pred_region
        // Predicated region
        $region33: #{tpu_custom_call.1} parent=31 // pred_check
          %p212 = pneg %p39
        $region34: #{tpu_custom_call.1} parent=31 // pred_check_branch
          %214 = sbr.rel (%p212) target = $region36
        $region35: #{tpu_custom_call.1} parent=31 // pred_region
          %s215 = sand.u32 %s29, 1
          %s216 = scalar_lea.sflag [#allocation3], %s215
          %s217 = sand.u32 %s29, 1
          %s218 = smul.addr %s217, 64
          %s219 = scalar_lea.vmem [#allocation2], %s218
          %s221 = ssub.s32 1024, 1024
          %222 = vsyncadd %s216, %s221
          %s223 = smul.addr %s19, 8
          %s224 = smul.addr %s223, 128
          %s225 = scalar_lea.hbm %s0, %s224
          %s226 = sshll.u32 %s219, 4
          %s227 = int_to_ptr.vmem [resolvable:$true] %s226
          %232 = dma.hbm_to_vmem [thread:$0]  %s225, 1024, %s227, %s216, 256, 256, 16
        $region36: #{tpu_custom_call.1} parent=31 // pred_fallthru
          _
      $region32: #{tpu_custom_call.1} parent=5 // pred_fallthru
        _
      %p233 = scmp.le.s32.totalorder 1, %s19
      %p234 = scmp.lt.s32.totalorder %s19, 3
      %p235 = pnand %p233, %p234
      %p236 = pneg %p235
      // Predicated region
      $region37: #{tpu_custom_call.1} parent=5 // pred_check
        _
      $region38: #{tpu_custom_call.1} parent=5 // pred_check_branch
        %238 = sbr.rel (%p235) target = $region40
      $region39: #{tpu_custom_call.1} parent=5 // pred_region
        %s239 = ssub.s32 %s19, 1
        %s240 = sand.u32 %s32, 1
        %s241 = scalar_lea.sflag [#allocation3], %s240
        %s242 = sand.u32 %s32, 1
        %s243 = smul.addr %s242, 64
        %s244 = scalar_lea.vmem [#allocation2], %s243
        // Predicated region
        $region41: #{tpu_custom_call.1} parent=39 // pred_check
          %p245 = pneg %p45
        $region42: #{tpu_custom_call.1} parent=39 // pred_check_branch
          %247 = sbr.rel (%p245) target = $region44
        $region43: #{tpu_custom_call.1} parent=39 // pred_region
          %248 = dma.done %s241, 1024
        $region44: #{tpu_custom_call.1} parent=39 // pred_fallthru
          _
        %s249 = sand.u32 %s32, 1
        %s250 = scalar_lea.sflag [#allocation3], %s249
        %s251 = sand.u32 %s32, 1
        %s252 = smul.addr %s251, 64
        %s253 = scalar_lea.vmem [#allocation2], %s252
        %p254 = pneg %p45
        %p255 = pneg %p42
        %p256 = pneg %p66
        %p257 = pneg %p63
        %p258 = pneg %p87
        %p259 = pneg %p84
        %p260 = pneg %p108
        %p261 = pneg %p105
        %p262 = pneg %p129
        %p263 = pneg %p126
        %p264 = pneg %p155
        %p265 = pneg %p152
        %p266 = scmp.lt.s32.totalorder %s24, 1
        %s267 = scalar_select %p266, %s24, 1
        %s268 = smul.addr %s267, 4
        %s269 = smul.addr %s268, 8
        %s270 = scalar_lea.vmem %s5, %s269
        %p271 = pneg %p181
        %p272 = pneg %p178
        %s273 = sand.u32 %s168, 1
        %s274 = scalar_lea.sflag [#allocation4], %s273
        %s275 = sand.u32 %s168, 1
        %s276 = smul.addr %s275, 4
        %s277 = scalar_lea.vmem [#allocation5], %s276
        %p278 = scmp.lt.s32.totalorder %s24, 1
        %s279 = scalar_select %p278, %s24, 1
        %s280 = smul.addr %s279, 4
        %s281 = smul.addr %s280, 8
        %s282 = scalar_lea.vmem %s5, %s281
        %v283 = vld [vmem:[%s244] sm:$0xff]
        %v284 = vld [vmem:[%s244 + $0x8] sm:$0xff]
        %v285 = vld [vmem:[%s244 + $0x10] sm:$0xff]
        %v286 = vld [vmem:[%s244 + $0x18] sm:$0xff]
        %v287 = vld [vmem:[%s244 + $0x20] sm:$0xff]
        %v288 = vld [vmem:[%s244 + $0x28] sm:$0xff]
        %v289 = vld [vmem:[%s244 + $0x30] sm:$0xff]
        %v290 = vld [vmem:[%s244 + $0x38] sm:$0xff]
        %v291 = vadd.f32 %v283, %v284
        %292 = vadd.xlane.f32.xlu0 %v291
        %v293 = vpop.xlane.xlu0 %292
        %v294 = vadd.f32 %v285, %v286
        %295 = vadd.xlane.f32.xlu0 %v294
        %v296 = vpop.xlane.xlu0 %295
        %v297 = vadd.f32 %v287, %v288
        %298 = vadd.xlane.f32.xlu0 %v297
        %v299 = vpop.xlane.xlu0 %298
        %v300 = vadd.f32 %v289, %v290
        %301 = vadd.xlane.f32.xlu0 %v300
        %v302 = vpop.xlane.xlu0 %301
        %v303 = vrcp.pop 256.0
        %v304 = vmul.f32 %v293, %v303
        %v305 = vmul.f32 %v296, %v303
        %v306 = vmul.f32 %v299, %v303
        %v307 = vmul.f32 %v302, %v303
        %v308 = vmax.f32 %v283, %v284
        %309 = vmax.xlane.f32.xlu0 %v308
        %v310 = vpop.xlane.xlu0 %309
        %v311 = vmax.f32 %v285, %v286
        %312 = vmax.xlane.f32.xlu0 %v311
        %v313 = vpop.xlane.xlu0 %312
        %v314 = vmax.f32 %v287, %v288
        %315 = vmax.xlane.f32.xlu0 %v314
        %v316 = vpop.xlane.xlu0 %315
        %v317 = vmax.f32 %v289, %v290
        %318 = vmax.xlane.f32.xlu0 %v317
        %v319 = vpop.xlane.xlu0 %318
        %v324 = vlaneseq
        %v325 = vand.u32 %v324, 127
        %v326 = vlaneseq
        %v327 = vshrl.u32 %v326, 7
        %v328 = vsub.s32 %v325, %v327
        %v329 = vrot.slane %v304, %v328
        %v330 = vadd.s32 %v325, 4294967288
        %v331 = vlaneseq
        %v332 = vshrl.u32 %v331, 7
        %v333 = vsub.s32 %v330, %v332
        %v334 = vrot.slane %v305, %v333
        %vm335 = vcmask 130112
        %v336 = vsel %vm335, %v334, %v329
        %v337 = vadd.s32 %v325, 4294967280
        %v338 = vlaneseq
        %v339 = vshrl.u32 %v338, 7
        %v340 = vsub.s32 %v337, %v339
        %v341 = vrot.slane %v306, %v340
        %vm342 = vcmask 195712
        %v343 = vsel %vm342, %v341, %v336
        %v344 = vadd.s32 %v325, 4294967272
        %v345 = vlaneseq
        %v346 = vshrl.u32 %v345, 7
        %v347 = vsub.s32 %v344, %v346
        %v348 = vrot.slane %v307, %v347
        %vm349 = vcmask 261312
        %v350 = vsel %vm349, %v348, %v343
        %v356 = vlaneseq
        %v357 = vshrl.u32 %v356, 7
        %v358 = vsub.s32 %v325, %v357
        %v359 = vrot.slane %v310, %v358
        %v360 = vlaneseq
        %v361 = vshrl.u32 %v360, 7
        %v362 = vsub.s32 %v330, %v361
        %v363 = vrot.slane %v313, %v362
        %v364 = vsel %vm335, %v363, %v359
        %v365 = vlaneseq
        %v366 = vshrl.u32 %v365, 7
        %v367 = vsub.s32 %v337, %v366
        %v368 = vrot.slane %v316, %v367
        %v369 = vsel %vm342, %v368, %v364
        %v370 = vlaneseq
        %v371 = vshrl.u32 %v370, 7
        %v372 = vsub.s32 %v344, %v371
        %v373 = vrot.slane %v319, %v372
        %v374 = vsel %vm349, %v373, %v369
        %vm376 = vcmask 1040384
        %v377 = vsel %vm376, %v350, %v374
        %v378 = vld [vmem:[%s1] sm:$0xff]
        %v379 = vld [vmem:[%s1 + $0x8] sm:$0xff]
        %v380 = vld [vmem:[%s1 + $0x10] sm:$0xff]
        %v381 = vld [vmem:[%s1 + $0x18] sm:$0xff]
        %v382 = vld [vmem:[%s2] sm:$0x1]
        %v384 = vlaneseq
        %v385 = vshrl.u32 %v384, 7
        %v386 = vsub.s32 0, %v385
        %v387 = vrot.slane %v382, %v386
        %vm389 = vcmask 261120
        %v391 = vsel %vm389, %v377, 0
        %393 = vmatprep.subr.mxu0 0.0
        %394 = vmatpush1.msra.mxu0 %v378
        %395 = vmatprep.subr.mxu0 0.0
        %396 = vmatpush1.msra.mxu0 %v379
        %397 = vmatprep.subr.mxu0 0.0
        %398 = vmatpush1.msra.mxu0 %v380
        %399 = vmatprep.subr.mxu0 0.0
        %400 = vmatpush1.msra.mxu0 %v381
        %401 = vmatprep.subr.mxu0 0.0
        %402 = vmatpush1.msra.mxu0 0.0
        %403 = vmatprep.subr.mxu0 0.0
        %404 = vmatpush1.msra.mxu0 0.0
        %405 = vmatprep.subr.mxu0 0.0
        %406 = vmatpush1.msra.mxu0 0.0
        %407 = vmatprep.subr.mxu0 0.0
        %408 = vmatpush1.msra.mxu0 0.0
        %409 = vmatprep.subr.mxu0 0.0
        %410 = vmatpush1.msra.mxu0 0.0
        %411 = vmatprep.subr.mxu0 0.0
        %412 = vmatpush1.msra.mxu0 0.0
        %413 = vmatprep.subr.mxu0 0.0
        %414 = vmatpush1.msra.mxu0 0.0
        %415 = vmatprep.subr.mxu0 0.0
        %416 = vmatpush1.msra.mxu0 0.0
        %417 = vmatprep.subr.mxu0 0.0
        %418 = vmatpush1.msra.mxu0 0.0
        %419 = vmatprep.subr.mxu0 0.0
        %420 = vmatpush1.msra.mxu0 0.0
        %421 = vmatprep.subr.mxu0 0.0
        %422 = vmatpush1.msra.mxu0 0.0
        %423 = vmatprep.subr.mxu0 0.0
        %424 = vmatpush1.msra.mxu0 0.0
        %425 = vmatprep.subr.mxu0 0.0
        %426 = vmatpush1.msra.mxu0 0.0
        %427 = vmatprep.subr.mxu0 0.0
        %428 = vmatpush1.msra.mxu0 0.0
        %429 = vmatprep.subr.mxu0 0.0
        %430 = vmatpush1.msra.mxu0 0.0
        %431 = vmatprep.subr.mxu0 0.0
        %432 = vmatpush1.msra.mxu0 0.0
        %433 = vmatprep.subr.mxu0 0.0
        %434 = vmatpush1.msra.mxu0 0.0
        %435 = vmatprep.subr.mxu0 0.0
        %436 = vmatpush1.msra.mxu0 0.0
        %437 = vmatprep.subr.mxu0 0.0
        %438 = vmatpush1.msra.mxu0 0.0
        %439 = vmatprep.subr.mxu0 0.0
        %440 = vmatpush1.msra.mxu0 0.0
        %441 = vmatprep.subr.mxu0 0.0
        %442 = vmatpush1.msra.mxu0 0.0
        %443 = vmatprep.subr.mxu0 0.0
        %444 = vmatpush1.msra.mxu0 0.0
        %445 = vmatprep.subr.mxu0 0.0
        %446 = vmatpush1.msra.mxu0 0.0
        %447 = vmatprep.subr.mxu0 0.0
        %448 = vmatpush1.msra.mxu0 0.0
        %449 = vmatprep.subr.mxu0 0.0
        %450 = vmatpush1.msra.mxu0 0.0
        %451 = vmatprep.subr.mxu0 0.0
        %452 = vmatpush1.msra.mxu0 0.0
        %453 = vmatprep.subr.mxu0 0.0
        %454 = vmatpush1.msra.mxu0 0.0
        %455 = vmatprep.subr.mxu0 0.0
        %456 = vmatpush1.msra.mxu0 0.0
        %457 = vmatprep.mubr.f32.mxu0 0.0
        %458 = vmatmul.mubr.f32.gmra.mrb[0].mxu0 %v391
        %v459 = vpop.f32.mrb[0].mxu0
        %v460 = vadd.f32 %v387, %v459
        %v461 = vpop.f32.mrb[0].mxu0
        %462 = vdwg.mxu0
        %vm463 = vcmp.gt.f32.partialorder %v460, 0.0
        %v464 = vmul.f32 %v460, 0.01
        %v465 = vsel %vm463, %v460, %v464
        %v466 = vld [vmem:[%s3] sm:$0x3]
        %v467 = vld [vmem:[%s4] sm:$0x1]
        %v469 = vlaneseq
        %v470 = vshrl.u32 %v469, 7
        %v471 = vsub.s32 0, %v470
        %v472 = vrot.slane %v467, %v471
        %vm474 = vcmask 15360
        %v476 = vsel %vm474, %v465, 0
        %vm478 = vcmask 1041408
        %v480 = vsel %vm478, %v466, 0
        %482 = vmatprep.subr.mxu0 0.0
        %483 = vmatpush1.msra.mxu0 %v480
        %484 = vmatprep.subr.mxu0 0.0
        %485 = vmatpush1.msra.mxu0 0.0
        %486 = vmatprep.subr.mxu0 0.0
        %487 = vmatpush1.msra.mxu0 0.0
        %488 = vmatprep.subr.mxu0 0.0
        %489 = vmatpush1.msra.mxu0 0.0
        %490 = vmatprep.subr.mxu0 0.0
        %491 = vmatpush1.msra.mxu0 0.0
        %492 = vmatprep.subr.mxu0 0.0
        %493 = vmatpush1.msra.mxu0 0.0
        %494 = vmatprep.subr.mxu0 0.0
        %495 = vmatpush1.msra.mxu0 0.0
        %496 = vmatprep.subr.mxu0 0.0
        %497 = vmatpush1.msra.mxu0 0.0
        %498 = vmatprep.subr.mxu0 0.0
        %499 = vmatpush1.msra.mxu0 0.0
        %500 = vmatprep.subr.mxu0 0.0
        %501 = vmatpush1.msra.mxu0 0.0
        %502 = vmatprep.subr.mxu0 0.0
        %503 = vmatpush1.msra.mxu0 0.0
        %504 = vmatprep.subr.mxu0 0.0
        %505 = vmatpush1.msra.mxu0 0.0
        %506 = vmatprep.subr.mxu0 0.0
        %507 = vmatpush1.msra.mxu0 0.0
        %508 = vmatprep.subr.mxu0 0.0
        %509 = vmatpush1.msra.mxu0 0.0
        %510 = vmatprep.subr.mxu0 0.0
        %511 = vmatpush1.msra.mxu0 0.0
        %512 = vmatprep.subr.mxu0 0.0
        %513 = vmatpush1.msra.mxu0 0.0
        %514 = vmatprep.subr.mxu0 0.0
        %515 = vmatpush1.msra.mxu0 0.0
        %516 = vmatprep.subr.mxu0 0.0
        %517 = vmatpush1.msra.mxu0 0.0
        %518 = vmatprep.subr.mxu0 0.0
        %519 = vmatpush1.msra.mxu0 0.0
        %520 = vmatprep.subr.mxu0 0.0
        %521 = vmatpush1.msra.mxu0 0.0
        %522 = vmatprep.subr.mxu0 0.0
        %523 = vmatpush1.msra.mxu0 0.0
        %524 = vmatprep.subr.mxu0 0.0
        %525 = vmatpush1.msra.mxu0 0.0
        %526 = vmatprep.subr.mxu0 0.0
        %527 = vmatpush1.msra.mxu0 0.0
        %528 = vmatprep.subr.mxu0 0.0
        %529 = vmatpush1.msra.mxu0 0.0
        %530 = vmatprep.subr.mxu0 0.0
        %531 = vmatpush1.msra.mxu0 0.0
        %532 = vmatprep.subr.mxu0 0.0
        %533 = vmatpush1.msra.mxu0 0.0
        %534 = vmatprep.subr.mxu0 0.0
        %535 = vmatpush1.msra.mxu0 0.0
        %536 = vmatprep.subr.mxu0 0.0
        %537 = vmatpush1.msra.mxu0 0.0
        %538 = vmatprep.subr.mxu0 0.0
        %539 = vmatpush1.msra.mxu0 0.0
        %540 = vmatprep.subr.mxu0 0.0
        %541 = vmatpush1.msra.mxu0 0.0
        %542 = vmatprep.subr.mxu0 0.0
        %543 = vmatpush1.msra.mxu0 0.0
        %544 = vmatprep.subr.mxu0 0.0
        %545 = vmatpush1.msra.mxu0 0.0
        %546 = vmatprep.mubr.f32.mxu0 0.0
        %547 = vmatmul.mubr.f32.gmra.mrb[0].mxu0 %v476
        %v548 = vpop.f32.mrb[0].mxu0
        %v549 = vadd.f32 %v472, %v548
        %v550 = vpop.f32.mrb[0].mxu0
        %551 = vdwg.mxu0
        %v553 = vrot.slane %v549, 1
        %v555 = vadd.f32 %v549, %v553
        %v556 = vmul.f32 %v555, 0.5
        %v557 = vtanh.pop %v556
        %v558 = vadd.f32 %v557, 1.0
        %v559 = vmul.f32 %v558, 0.5
        %v560 = vlaneseq
        %v561 = vshrl.u32 %v560, 7
        %v562 = vsub.s32 0, %v561
        %v563 = vrot.slane %v559, %v562
        %565 = vbcast.lane.b32.xlu0 %v563, 256
        %v566 = vpop.permute.xlu0 %565
        %s568 = sor.u32 256, 8
        %569 = vbcast.lane.b32.xlu0 %v563, %s568
        %v570 = vpop.permute.xlu0 %569
        %s572 = sor.u32 256, 16
        %573 = vbcast.lane.b32.xlu0 %v563, %s572
        %v574 = vpop.permute.xlu0 %573
        %s576 = sor.u32 256, 24
        %577 = vbcast.lane.b32.xlu0 %v563, %s576
        %v578 = vpop.permute.xlu0 %577
        %vm579 = vcmask 7168
        %580 = vst.msk [vmem:[%s282] sm:$0xff] %vm579, %v566
        %581 = vst.msk [vmem:[%s282 + $0x8] sm:$0xff] %vm579, %v570
        %582 = vst.msk [vmem:[%s282 + $0x10] sm:$0xff] %vm579, %v574
        %583 = vst.msk [vmem:[%s282 + $0x18] sm:$0xff] %vm579, %v578
        %v584 = vmul.f32 %v283, %v566
        %v585 = vmul.f32 %v284, %v566
        %v586 = vmul.f32 %v285, %v570
        %v587 = vmul.f32 %v286, %v570
        %v588 = vmul.f32 %v287, %v574
        %v589 = vmul.f32 %v288, %v574
        %v590 = vmul.f32 %v289, %v578
        %v591 = vmul.f32 %v290, %v578
        %v592 = vadd.f32 %v584, %v586
        %v593 = vadd.f32 %v592, %v588
        %v594 = vadd.f32 %v593, %v590
        %v595 = vrot.slane %v594, 4
        %v596 = vadd.f32 %v594, %v595
        %v597 = vrot.slane %v596, 2
        %v598 = vadd.f32 %v596, %v597
        %v599 = vrot.slane %v598, 1
        %v600 = vadd.f32 %v598, %v599
        %v601 = vadd.f32 %v585, %v587
        %v602 = vadd.f32 %v601, %v589
        %v603 = vadd.f32 %v602, %v591
        %v604 = vrot.slane %v603, 4
        %v605 = vadd.f32 %v603, %v604
        %v606 = vrot.slane %v605, 2
        %v607 = vadd.f32 %v605, %v606
        %v608 = vrot.slane %v607, 1
        %v609 = vadd.f32 %v607, %v608
        %v610 = vrcp.pop 32.0
        %v611 = vmul.f32 %v600, %v610
        %v612 = vmul.f32 %v609, %v610
        %v615 = vcombine.low %v611, %v612
        %v617 = vunpack.c.l.s4 1966171168
        %v618 = vunpack.c.0.s8 %v617
        %v619 = vlaneseq
        %v620 = vshrl.u32 %v619, 7
        %v621 = vsub.s32 %v618, %v620
        %v622 = vrot.slane %v615, %v621
        %v624 = vunpack.c.l.s4 1966171168
        %v625 = vunpack.c.0.s8 %v624
        %v626 = vlaneseq
        %v627 = vshrl.u32 %v626, 7
        %v628 = vsub.s32 %v625, %v627
        %v629 = vrot.slane %v622, %v628
        %v631 = vlaneseq
        %vm632 = vcmp.ge.s32.totalorder %v631, 0
        %vm633 = vcmp.lt.s32.totalorder %v631, 256
        %vm634 = vmand %vm632, %vm633
        %635 = vst.msk [vmem:[%s277] ss:$2 sm:$0x3] %vm634, %v629
        %v636 = vmax.f32 %v584, %v588
        %v637 = vmax.f32 %v586, %v590
        %v638 = vmax.f32 %v636, %v637
        %v639 = vrot.slane %v638, 4
        %v640 = vmax.f32 %v638, %v639
        %v641 = vrot.slane %v640, 2
        %v642 = vmax.f32 %v640, %v641
        %v643 = vrot.slane %v642, 1
        %v644 = vmax.f32 %v642, %v643
        %v645 = vmax.f32 %v585, %v589
        %v646 = vmax.f32 %v587, %v591
        %v647 = vmax.f32 %v645, %v646
        %v648 = vrot.slane %v647, 4
        %v649 = vmax.f32 %v647, %v648
        %v650 = vrot.slane %v649, 2
        %v651 = vmax.f32 %v649, %v650
        %v652 = vrot.slane %v651, 1
        %v653 = vmax.f32 %v651, %v652
        %v656 = vcombine.low %v644, %v653
        %v658 = vunpack.c.l.s4 1966171168
        %v659 = vunpack.c.0.s8 %v658
        %v660 = vlaneseq
        %v661 = vshrl.u32 %v660, 7
        %v662 = vsub.s32 %v659, %v661
        %v663 = vrot.slane %v656, %v662
        %v665 = vunpack.c.l.s4 1966171168
        %v666 = vunpack.c.0.s8 %v665
        %v667 = vlaneseq
        %v668 = vshrl.u32 %v667, 7
        %v669 = vsub.s32 %v666, %v668
        %v670 = vrot.slane %v663, %v669
        %s672 = scalar_lea.vmem %s277, 1 [#allocation5]
        %673 = vst.msk [vmem:[%s672] ss:$2 sm:$0x3] %vm634, %v670
        %p674 = scmp.lt.s32.totalorder %s24, 1
        %s675 = scalar_select %p674, %s24, 1
        %s676 = smul.addr %s675, 4
        %s677 = smul.addr %s676, 8
        %s678 = scalar_lea.vmem %s5, %s677
        %s679 = sand.u32 %s168, 1
        %s680 = scalar_lea.sflag [#allocation4], %s679
        %s681 = sand.u32 %s168, 1
        %s682 = smul.addr %s681, 4
        %s683 = scalar_lea.vmem [#allocation5], %s682
        // Predicated region
        $region45: #{tpu_custom_call.1} parent=39 // pred_check
          %p684 = pneg %p152
        $region46: #{tpu_custom_call.1} parent=39 // pred_check_branch
          %686 = sbr.rel (%p684) target = $region48
        $region47: #{tpu_custom_call.1} parent=39 // pred_region
          _
        $region48: #{tpu_custom_call.1} parent=39 // pred_fallthru
          _
        // Predicated region
        $region49: #{tpu_custom_call.1} parent=39 // pred_check
          %p687 = pneg %p178
        $region50: #{tpu_custom_call.1} parent=39 // pred_check_branch
          %689 = sbr.rel (%p687) target = $region52
        $region51: #{tpu_custom_call.1} parent=39 // pred_region
          %s691 = ssub.s32 64, 64
          %692 = vsyncadd %s680, %s691
          %s693 = smul.addr %s24, 2
          %s694 = smul.addr %s693, 32
          %s695 = scalar_lea.hbm %s6, %s694
          %s697 = sshll.u32 %s683, 4
          %s698 = int_to_ptr.vmem [resolvable:$true] %s697
          %700 = dma.vmem_to_hbm [thread:$0]  %s698, 64, %s695, %s680
        $region52: #{tpu_custom_call.1} parent=39 // pred_fallthru
          _
      $region40: #{tpu_custom_call.1} parent=5 // pred_fallthru
        _
      %p701 = scmp.le.s32.totalorder 2, %s19
      // Predicated region
      $region53: #{tpu_custom_call.1} parent=5 // pred_check
        %p702 = pneg %p701
      $region54: #{tpu_custom_call.1} parent=5 // pred_check_branch
        %704 = sbr.rel (%p702) target = $region56
      $region55: #{tpu_custom_call.1} parent=5 // pred_region
        %s705 = ssub.s32 %s19, 2
        // Predicated region
        $region57: #{tpu_custom_call.1} parent=55 // pred_check
          %p706 = pneg %p158
        $region58: #{tpu_custom_call.1} parent=55 // pred_check_branch
          %708 = sbr.rel (%p706) target = $region60
        $region59: #{tpu_custom_call.1} parent=55 // pred_region
          %p709 = scmp.lt.s32.totalorder %s25, 1
          %s710 = scalar_select %p709, %s25, 1
          %s711 = smul.addr %s710, 4
          %s712 = smul.addr %s711, 8
          %s713 = scalar_lea.vmem %s5, %s712
        $region60: #{tpu_custom_call.1} parent=55 // pred_fallthru
          _
        // Predicated region
        $region61: #{tpu_custom_call.1} parent=55 // pred_check
          %p714 = pneg %p184
        $region62: #{tpu_custom_call.1} parent=55 // pred_check_branch
          %716 = sbr.rel (%p714) target = $region64
        $region63: #{tpu_custom_call.1} parent=55 // pred_region
          %s717 = sand.u32 %s169, 1
          %s718 = scalar_lea.sflag [#allocation4], %s717
          %s719 = sand.u32 %s169, 1
          %s720 = smul.addr %s719, 4
          %s721 = scalar_lea.vmem [#allocation5], %s720
          %722 = dma.done %s718, 64
        $region64: #{tpu_custom_call.1} parent=55 // pred_fallthru
          _
      $region56: #{tpu_custom_call.1} parent=5 // pred_fallthru
        _
    $region6: #{tpu_custom_call.1} parent=1 // loop_footer
      %s23 = sadd.s32 1, %s19
    $region7: #{tpu_custom_call.1} parent=1 // loop_footer_branch
      %18 = sbr.rel target = $region3
    $region8: #{tpu_custom_call.1} parent=1 // loop_exit
      _
    %723 = vsyncpa [#allocation3], 1
    %s724 = scalar_lea.sflag [#allocation3], 1
    %725 = vsyncpa %s724, 1
    %726 = vsyncpa [#allocation4], 1
    %s727 = scalar_lea.sflag [#allocation4], 1
    %728 = vsyncpa %s727, 1

</llo_original>
